<compile_context>
chip_gen: v7x
topology: tpu7x:2x2x1
jax: 0.10.0
libtpu: 0.0.40
codegen_flags: <defaults>
</compile_context>

<pallas_src>
import functools

import jax
import jax.numpy as jnp
from jax.experimental import pallas as pl
from jax.experimental.pallas import tpu as pltpu


# ---------------------------------------------------------------------------
# Hardware-dependent configuration (VMEM budget, tile targets, EUP exp dtype).
# ---------------------------------------------------------------------------
def _hw_config():
    kind = ""
    try:
        kind = jax.devices()[0].device_kind.lower()
    except Exception:
        pass

    vmem_cap = None
    try:
        vmem_cap = int(getattr(pltpu.get_tpu_info(), "vmem_capacity_bytes"))
    except Exception:
        vmem_cap = None

    is_v5e = ("v5 lite" in kind) or ("v5e" in kind) or ("v5lite" in kind)
    is_v7 = "v7" in kind
    if vmem_cap is None:
        vmem_cap = (64 if is_v7 else 128) * 1024 * 1024

    # Leave headroom under physical capacity (v7x: 64 MiB, v5e/v6e: 128 MiB).
    vmem_limit = int(min(100 * 1024 * 1024, (vmem_cap * 3) // 4))

    if is_v7:
        tq_target, tk_target = 256, 128     # 64 MiB VMEM: shrink only the kv tile
    else:
        tq_target, tk_target = 512, 512     # 128 MiB VMEM: bigger tiles, fewer steps

    # v5e has no bf16 EUP; v6e/v7x benefit from bf16 exp.
    exp_dtype = jnp.float32 if is_v5e else jnp.bfloat16
    return vmem_limit, tq_target, tk_target, exp_dtype


def _tiling(n, target):
    """Return (tile, padded_n): largest power-of-two tile <= target dividing n,
    else pad n to a multiple of 128 (MXU-friendly) and use tile=128."""
    if n <= 8:
        return n, n
    t = target
    while t >= 8:
        if n % t == 0:
            return t, n
        t //= 2
    tile = min(128, target)
    return tile, ((n + tile - 1) // tile) * tile


def _const_spec(shape):
    """Grid-invariant block: constant index_map + single-buffered pipeline."""
    zeros = (0,) * len(shape)
    return pl.BlockSpec(shape, lambda *_: zeros, pipeline_mode=pl.Buffered(1))


# ---------------------------------------------------------------------------
# Kernel 1: fused QKV projection, head-major (B, H, N, D) bf16 outputs.
# ---------------------------------------------------------------------------
def _qkv_proj_kernel(x_ref, w_ref, q_ref, k_ref, v_ref, *, num_heads):
    tn, C = x_ref.shape[1], x_ref.shape[2]
    H = num_heads
    D = C // H
    # Single MXU stream: x_tile (tn, C) @ w_fused (C, 3C), f32 accumulation.
    qkv = jnp.dot(x_ref[0], w_ref[...], preferred_element_type=jnp.float32)
    qkv = qkv.astype(jnp.bfloat16)                        # (tn, 3C)

    def head_major(m):                                    # (tn, C) -> (H, tn, D)
        return jnp.transpose(m.reshape(tn, H, D), (1, 0, 2))

    q_ref[0] = head_major(qkv[:, :C])        # scale already folded into Wq cols
    k_ref[0] = head_major(qkv[:, C:2 * C])
    v_ref[0] = head_major(qkv[:, 2 * C:])


# ---------------------------------------------------------------------------
# Kernel 2: flash-style attention (online softmax) + fused output projection.
# ---------------------------------------------------------------------------
def _attn_kernel(q_ref, k_ref, v_ref, wp_ref, bp_ref, o_ref,
                 m_sc, l_sc, acc_sc, *, kv_tile, n_valid, exp_dtype):
    kv = pl.program_id(2)

    @pl.when(kv == 0)
    def _():
        m_sc[...] = jnp.full(m_sc.shape, -jnp.inf, dtype=jnp.float32)
        l_sc[...] = jnp.zeros(l_sc.shape, dtype=jnp.float32)
        acc_sc[...] = jnp.zeros(acc_sc.shape, dtype=jnp.float32)

    q = q_ref[0]            # (H, tq, D) bf16, already head-major, pre-scaled
    k = k_ref[0]            # (H, tk, D) bf16
    v = v_ref[0]            # (H, tk, D) bf16

    # Scores for all heads at once: (H, tq, tk), f32 MXU accumulation.
    s = jnp.einsum('hqd,hkd->hqk', q, k, preferred_element_type=jnp.float32)

    if n_valid is not None:   # static Python check: only emitted if N was padded
        col = kv * kv_tile + jax.lax.broadcasted_iota(jnp.int32, s.shape, 2)
        s = jnp.where(col < n_valid, s, -jnp.inf)

    # Online softmax; running stats kept in f32.
    m_prev = m_sc[...]                                    # (H, tq, 1)
    m_new = jnp.maximum(m_prev, s.max(axis=-1, keepdims=True))
    alpha = jnp.exp(m_prev - m_new)                       # small, f32
    p = jnp.exp((s - m_new).astype(exp_dtype))            # bf16 EUP on v6e/v7x
    l_sc[...] = alpha * l_sc[...] + jnp.sum(
        p.astype(jnp.float32), axis=-1, keepdims=True)
    acc_sc[...] = alpha * acc_sc[...] + jnp.einsum(
        'hqk,hkd->hqd', p.astype(jnp.bfloat16), v,
        preferred_element_type=jnp.float32)
    m_sc[...] = m_new

    @pl.when(kv == pl.num_programs(2) - 1)
    def _():
        inv_l = pl.reciprocal(l_sc[...], approx=True)     # EUP slot
        out_h = acc_sc[...] * inv_l                       # (H, tq, D) f32
        H, tq, D = out_h.shape
        merged = jnp.transpose(out_h, (1, 0, 2)).reshape(tq, H * D)  # once per q tile
        y = jnp.dot(merged.astype(jnp.bfloat16), wp_ref[...],
                    preferred_element_type=jnp.float32)
        o_ref[0] = (y + bp_ref[...]).astype(o_ref.dtype)


# ---------------------------------------------------------------------------
# Wrapper
# ---------------------------------------------------------------------------
def attention_pallas(x, w_qkv, w_proj, b_proj, num_heads):
    """x: (B, N, C) f32.  w_qkv: (3C, C), w_proj: (C, C), b_proj: (C,)."""
    B, N, C = x.shape
    H = num_heads
    D = C // H
    scale = float(D) ** -0.5
    out_dtype = x.dtype

    vmem_limit, tq_target, tk_target, exp_dtype = _hw_config()

    tq, n_pad = _tiling(N, tq_target)
    tk, n_pad_k = _tiling(N, tk_target)
    n_pad = max(n_pad, n_pad_k)
    tn = tq                                  # projection row tile

    padded = n_pad != N
    x_in = x
    if padded:
        x_in = jnp.pad(x_in, ((0, 0), (0, n_pad - N), (0, 0)))
    x_in = x_in.astype(jnp.bfloat16)         # bf16 activations: halve x DMA

    # nn.Linear weights are (out, in); kernels compute x @ W^T.  Fuse q/k/v
    # into one (C, 3C) bf16 weight and fold the softmax scale into the q cols.
    w_fused = jnp.transpose(w_qkv).astype(jnp.float32)            # (C, 3C)
    w_fused = w_fused.at[:, :C].multiply(scale).astype(jnp.bfloat16)
    wp_t = jnp.transpose(w_proj).astype(jnp.bfloat16)             # (C, C)
    bp = b_proj.reshape(1, C).astype(jnp.float32)                 # (1, C)

    # ---------------- Kernel 1: fused QKV projection ----------------
    qkv_out = jax.ShapeDtypeStruct((B, H, n_pad, D), jnp.bfloat16)
    q, k, v = pl.pallas_call(
        functools.partial(_qkv_proj_kernel, num_heads=H),
        out_shape=(qkv_out, qkv_out, qkv_out),
        grid_spec=pltpu.PrefetchScalarGridSpec(
            num_scalar_prefetch=0,
            grid=(B, n_pad // tn),
            in_specs=[
                pl.BlockSpec((1, tn, C), lambda b, n: (b, n, 0)),
                _const_spec((C, 3 * C)),
            ],
            out_specs=(
                pl.BlockSpec((1, H, tn, D), lambda b, n: (b, 0, n, 0)),
                pl.BlockSpec((1, H, tn, D), lambda b, n: (b, 0, n, 0)),
                pl.BlockSpec((1, H, tn, D), lambda b, n: (b, 0, n, 0)),
            ),
        ),
        compiler_params=pltpu.CompilerParams(
            dimension_semantics=("parallel", "parallel"),
            vmem_limit_bytes=vmem_limit),
    )(x_in, w_fused)

    # ------- Kernel 2: flash attention + fused output projection -------
    kernel = functools.partial(
        _attn_kernel, kv_tile=tk,
        n_valid=(N if padded else None), exp_dtype=exp_dtype)
    out = pl.pallas_call(
        kernel,
        out_shape=jax.ShapeDtypeStruct((B, n_pad, C), out_dtype),
        grid_spec=pltpu.PrefetchScalarGridSpec(
            num_scalar_prefetch=0,
            grid=(B, n_pad // tq, n_pad // tk),
            in_specs=[
                pl.BlockSpec((1, H, tq, D), lambda b, qi, ki: (b, 0, qi, 0)),
                pl.BlockSpec((1, H, tk, D), lambda b, qi, ki: (b, 0, ki, 0)),
                pl.BlockSpec((1, H, tk, D), lambda b, qi, ki: (b, 0, ki, 0)),
                _const_spec((C, C)),
                _const_spec((1, C)),
            ],
            out_specs=pl.BlockSpec((1, tq, C), lambda b, qi, ki: (b, qi, 0)),
            scratch_shapes=[
                pltpu.VMEM((H, tq, 1), jnp.float32),   # running max
                pltpu.VMEM((H, tq, 1), jnp.float32),   # running sum
                pltpu.VMEM((H, tq, D), jnp.float32),   # output accumulator
            ],
        ),
        compiler_params=pltpu.CompilerParams(
            dimension_semantics=("parallel", "parallel", "arbitrary"),
            vmem_limit_bytes=vmem_limit),
    )(q, k, v, wp_t, bp)

    if padded:
        out = out[:, :N, :]
    return out


def attention_reference(x, w_qkv, w_proj, b_proj, num_heads):
    """Pure-JAX reference mirroring the PyTorch forward exactly (f32)."""
    B, N, C = x.shape
    D = C // num_heads
    scale = float(D) ** -0.5
    qkv = x @ w_qkv.T                                    # (B, N, 3C)
    qkv = qkv.reshape(B, N, 3, num_heads, D).transpose(2, 0, 3, 1, 4)
    q, k, v = qkv[0], qkv[1], qkv[2]                     # (B, H, N, D)
    attn = jnp.einsum("bhnd,bhmd->bhnm", q, k) * scale
    attn = jax.nn.softmax(attn, axis=-1)
    out = jnp.einsum("bhnm,bhmd->bhnd", attn, v)         # (B, H, N, D)
    out = out.transpose(0, 2, 1, 3).reshape(B, N, C)
    return out @ w_proj.T + b_proj


if __name__ == "__main__":
    B, N, C = 2, 8, 32
    num_heads = 8

    key = jax.random.PRNGKey(0)
    kx, kqkv, kp, kb = jax.random.split(key, 4)

    x = jax.random.normal(kx, (B, N, C), dtype=jnp.float32)
    w_qkv = jax.random.normal(kqkv, (3 * C, C), dtype=jnp.float32) * (C ** -0.5)
    w_proj = jax.random.normal(kp, (C, C), dtype=jnp.float32) * (C ** -0.5)
    b_proj = jax.random.normal(kb, (C,), dtype=jnp.float32) * 0.01

    out = attention_pallas(x, w_qkv, w_proj, b_proj, num_heads)
    out = jax.block_until_ready(out)

    ref = attention_reference(x, w_qkv, w_proj, b_proj, num_heads)
    assert out.shape == (B, N, C)
    # bf16 MXU operands + bf16 exp + approx reciprocal -> loosened tolerance.
    assert jnp.allclose(out, ref, atol=5e-2, rtol=5e-2), (
        f"max abs err = {jnp.max(jnp.abs(out - ref))}")

    print("KERNEL_OK")
</pallas_src>

<mosaic_0001>
module attributes {stable_mosaic.version = 11 : i64} {
  func.func @_qkv_proj_kernel(%arg0: i32, %arg1: i32, %arg2: memref<1x8x32xbf16, #tpu.memory_space<vmem>>, %arg3: memref<32x96xbf16, #tpu.memory_space<vmem>>, %arg4: memref<1x8x8x4xbf16, #tpu.memory_space<vmem>>, %arg5: memref<1x8x8x4xbf16, #tpu.memory_space<vmem>>, %arg6: memref<1x8x8x4xbf16, #tpu.memory_space<vmem>>) attributes {dimension_semantics = [#tpu.dimension_semantics<parallel>, #tpu.dimension_semantics<parallel>], iteration_bounds = array<i64: 2, 1>, scalar_prefetch = 0 : i64, scratch_operands = 0 : i64, tpu.core_type = #tpu.core_type<tc>, window_params = [{transform_indices = @transform_0, window_bounds = array<i64: 1, 8, 32>}, {pipeline_mode = #tpu.pipeline_mode<synchronous>, transform_indices = @transform_1, window_bounds = array<i64: 32, 96>}, {transform_indices = @transform_2, window_bounds = array<i64: 1, 8, 8, 4>}, {transform_indices = @transform_3, window_bounds = array<i64: 1, 8, 8, 4>}, {transform_indices = @transform_4, window_bounds = array<i64: 1, 8, 8, 4>}]} {
    %c0 = arith.constant 0 : index
    %c0_0 = arith.constant 0 : index
    %c0_1 = arith.constant 0 : index
    %0 = vector.load %arg2[%c0, %c0_0, %c0_1] : memref<1x8x32xbf16, #tpu.memory_space<vmem>>, vector<1x8x32xbf16>
    %1 = vector.shape_cast %0 : vector<1x8x32xbf16> to vector<8x32xbf16>
    %c0_2 = arith.constant 0 : index
    %c0_3 = arith.constant 0 : index
    %2 = vector.load %arg3[%c0_2, %c0_3] : memref<32x96xbf16, #tpu.memory_space<vmem>>, vector<32x96xbf16>
    %cst = arith.constant dense<0.000000e+00> : vector<8x96xf32>
    %3 = tpu.matmul %1, %2, %cst {dimension_numbers = #tpu.dot_dimension_numbers<[1], [0], [0], [1], [0, 0, 1, 1], [], []>} : vector<8x32xbf16>, vector<32x96xbf16>, vector<8x96xf32> -> vector<8x96xf32>
    %4 = arith.truncf %3 : vector<8x96xf32> to vector<8x96xbf16>
    %5 = vector.extract_strided_slice %4 {offsets = [0, 0], sizes = [8, 32], strides = [1, 1]} : vector<8x96xbf16> to vector<8x32xbf16>
    %6 = vector.shape_cast %5 : vector<8x32xbf16> to vector<8x8x4xbf16>
    %7 = tpu.transpose %6, [1, 0, 2] : vector<8x8x4xbf16> -> vector<8x8x4xbf16>
    %c0_4 = arith.constant 0 : index
    %c0_5 = arith.constant 0 : index
    %c0_6 = arith.constant 0 : index
    %c0_7 = arith.constant 0 : index
    %8 = vector.load %arg4[%c0_4, %c0_5, %c0_6, %c0_7] : memref<1x8x8x4xbf16, #tpu.memory_space<vmem>>, vector<1x8x8x4xbf16>
    %9 = vector.shape_cast %8 : vector<1x8x8x4xbf16> to vector<8x8x4xbf16>
    %10 = vector.shape_cast %7 : vector<8x8x4xbf16> to vector<1x8x8x4xbf16>
    tpu.vector_store %arg4[%c0_4, %c0_5, %c0_6, %c0_7], %10 {strides = array<i32>} : memref<1x8x8x4xbf16, #tpu.memory_space<vmem>>, vector<1x8x8x4xbf16>,
    %11 = vector.extract_strided_slice %4 {offsets = [0, 32], sizes = [8, 32], strides = [1, 1]} : vector<8x96xbf16> to vector<8x32xbf16>
    %12 = vector.shape_cast %11 : vector<8x32xbf16> to vector<8x8x4xbf16>
    %13 = tpu.transpose %12, [1, 0, 2] : vector<8x8x4xbf16> -> vector<8x8x4xbf16>
    %c0_8 = arith.constant 0 : index
    %c0_9 = arith.constant 0 : index
    %c0_10 = arith.constant 0 : index
    %c0_11 = arith.constant 0 : index
    %14 = vector.load %arg5[%c0_8, %c0_9, %c0_10, %c0_11] : memref<1x8x8x4xbf16, #tpu.memory_space<vmem>>, vector<1x8x8x4xbf16>
    %15 = vector.shape_cast %14 : vector<1x8x8x4xbf16> to vector<8x8x4xbf16>
    %16 = vector.shape_cast %13 : vector<8x8x4xbf16> to vector<1x8x8x4xbf16>
    tpu.vector_store %arg5[%c0_8, %c0_9, %c0_10, %c0_11], %16 {strides = array<i32>} : memref<1x8x8x4xbf16, #tpu.memory_space<vmem>>, vector<1x8x8x4xbf16>,
    %17 = vector.extract_strided_slice %4 {offsets = [0, 64], sizes = [8, 32], strides = [1, 1]} : vector<8x96xbf16> to vector<8x32xbf16>
    %18 = vector.shape_cast %17 : vector<8x32xbf16> to vector<8x8x4xbf16>
    %19 = tpu.transpose %18, [1, 0, 2] : vector<8x8x4xbf16> -> vector<8x8x4xbf16>
    %c0_12 = arith.constant 0 : index
    %c0_13 = arith.constant 0 : index
    %c0_14 = arith.constant 0 : index
    %c0_15 = arith.constant 0 : index
    %20 = vector.load %arg6[%c0_12, %c0_13, %c0_14, %c0_15] : memref<1x8x8x4xbf16, #tpu.memory_space<vmem>>, vector<1x8x8x4xbf16>
    %21 = vector.shape_cast %20 : vector<1x8x8x4xbf16> to vector<8x8x4xbf16>
    %22 = vector.shape_cast %19 : vector<8x8x4xbf16> to vector<1x8x8x4xbf16>
    tpu.vector_store %arg6[%c0_12, %c0_13, %c0_14, %c0_15], %22 {strides = array<i32>} : memref<1x8x8x4xbf16, #tpu.memory_space<vmem>>, vector<1x8x8x4xbf16>,
    return
  }
  func.func @transform_0(%arg0: i32, %arg1: i32) -> (i32, i32, i32) {
    %c0_i32 = arith.constant 0 : i32
    %c0_i32_0 = arith.constant 0 : i32
    return %arg0, %arg1, %c0_i32 : i32, i32, i32
  }
  func.func @transform_1(%arg0: i32, %arg1: i32) -> (i32, i32) {
    %c0_i32 = arith.constant 0 : i32
    %c0_i32_0 = arith.constant 0 : i32
    %c0_i32_1 = arith.constant 0 : i32
    return %c0_i32, %c0_i32_0 : i32, i32
  }
  func.func @transform_2(%arg0: i32, %arg1: i32) -> (i32, i32, i32, i32) {
    %c0_i32 = arith.constant 0 : i32
    %c0_i32_0 = arith.constant 0 : i32
    %c0_i32_1 = arith.constant 0 : i32
    return %arg0, %c0_i32, %arg1, %c0_i32_0 : i32, i32, i32, i32
  }
  func.func @transform_3(%arg0: i32, %arg1: i32) -> (i32, i32, i32, i32) {
    %c0_i32 = arith.constant 0 : i32
    %c0_i32_0 = arith.constant 0 : i32
    %c0_i32_1 = arith.constant 0 : i32
    return %arg0, %c0_i32, %arg1, %c0_i32_0 : i32, i32, i32, i32
  }
  func.func @transform_4(%arg0: i32, %arg1: i32) -> (i32, i32, i32, i32) {
    %c0_i32 = arith.constant 0 : i32
    %c0_i32_0 = arith.constant 0 : i32
    %c0_i32_1 = arith.constant 0 : i32
    return %arg0, %c0_i32, %arg1, %c0_i32_0 : i32, i32, i32, i32
  }
}

</mosaic_0001>

<llo_original>
// kernel: tpu_custom_call.1
$region0: #{tpu_custom_call.1}
  #allocation0 [shape = 'u32[]', space=smem, size = 0x4, offset = 0x4, fixed_abs, tag = 'smem constant byte address 0x4 - core index']
  #allocation1 [shape = 'u32[144,128]{1,0:T(1,128)}', space=vmem, size = 0x12000, scoped, tag = 'internal scratch']
  %s0 = inlined_call_operand.hbm [shape: bf16[2,8,32], index: 0, kind: input, shape index: {}]
  %s1 = inlined_call_operand.hbm [shape: bf16[32,96], index: 1, kind: input, shape index: {}]
  %s2 = inlined_call_operand.hbm [shape: bf16[2,8,8,4], index: 2, kind: output, shape index: {0}]
  %s3 = inlined_call_operand.hbm [shape: bf16[2,8,8,4], index: 3, kind: output, shape index: {1}]
  %s4 = inlined_call_operand.hbm [shape: bf16[2,8,8,4], index: 4, kind: output, shape index: {2}]
  %5 = xla_tuple %s2, %s3, %s4
  %s6 = sld [smem:[#allocation0]]
  $region65: #{tpu_custom_call.1} parent=0
    _
  %s8 = ssub.s32 1, %s6
  %s9 = scalar_select 0, %s8, %s6
  $region1: #{tpu_custom_call.1} parent=0
    #allocation2 [shape = 'u8[4096]{0}', space=vmem, size = 0x1000, scoped, tag = 'input window, operand 0']
    #allocation3 [shape = 's32[2]{0}', space=sflag, size = 0x8, scoped, tag = 'scoped memory for tpu_custom_call.1']
    #allocation4 [shape = 's32[2]{0}', space=sflag, size = 0x8, scoped, tag = 'scoped memory for tpu_custom_call.1']
    #allocation5 [shape = 'u8[8192]{0}', space=vmem, size = 0x2000, scoped, tag = 'input window, operand 1, single buffered']
    #allocation6 [shape = 's32[1]{0}', space=sflag, size = 0x4, scoped, tag = 'scoped memory for tpu_custom_call.1']
    #allocation7 [shape = 'u8[32768]{0}', space=vmem, size = 0x8000, scoped, tag = 'output window, operand 0']
    #allocation8 [shape = 'u8[32768]{0}', space=vmem, size = 0x8000, scoped, tag = 'output window, operand 1']
    #allocation9 [shape = 's32[2]{0}', space=sflag, size = 0x8, scoped, tag = 'scoped memory for tpu_custom_call.1']
    #allocation10 [shape = 'u8[32768]{0}', space=vmem, size = 0x8000, scoped, tag = 'output window, operand 2']
    %10 = vsyncpa [#allocation3], 0
    %s11 = scalar_lea.sflag [#allocation3], 1
    %12 = vsyncpa %s11, 0
    %13 = vsyncpa [#allocation6], 0
    %14 = vsyncpa [#allocation4], 0
    %s15 = scalar_lea.sflag [#allocation4], 1
    %16 = vsyncpa %s15, 0
    %17 = vsyncpa [#allocation9], 0
    %s18 = scalar_lea.sflag [#allocation9], 1
    %19 = vsyncpa %s18, 0
    loop: start=0, step=1, limit=4
    $region2: #{tpu_custom_call.1} parent=1 // loop_pre_header
      _
    $region3: #{tpu_custom_call.1} parent=1 // loop_header
      %s21 = sphi 0, %s25
      %p22 = scmp.ge.s32.totalorder %s21, 4
      %s28 = sphi 0, %s40
      %s29 = sphi 0, %s36
      %s30 = sphi 0, %s28
      %s31 = sphi 0, %s29
      %s32 = sphi 0, %s30
      %s33 = sphi 0, %s31
      %s45 = sphi 0, %s47
      %s48 = sphi 0, %s45
      %s49 = sphi 0, %s48
      %s65 = sphi 0, %s49
      %s69 = sphi 0, %s69
      %s71 = sphi 0, %s69
      %s72 = sphi 0, %s71
      %s86 = sphi 0, %s72
      %s94 = sphi 0, %s96
      %s97 = sphi 0, %s94
      %s98 = sphi 0, %s97
      %s114 = sphi 0, %s98
      %s122 = sphi 0, %s124
      %s125 = sphi 0, %s122
      %s126 = sphi 0, %s125
      %s142 = sphi 0, %s126
      %s150 = sphi 0, %s152
      %s153 = sphi 0, %s150
      %s154 = sphi 0, %s153
      %s170 = sphi 0, %s154
    $region4: #{tpu_custom_call.1} parent=1 // loop_header_branch
      %24 = sbr.rel (%p22) target = $region8
    $region5: #{tpu_custom_call.1} parent=1 // loop_body
      %s26 = ssub.s32 %s21, 1
      %s27 = ssub.s32 %s21, 2
      %s34 = sadd.s32 1, %s29
      %p35 = scmp.ge.s32.totalorder %s34, 1
      %s36 = scalar_select %p35, 0, %s34
      %s37 = sadd.s32 1, %s28
      %s38 = scalar_select %p35, %s37, %s28
      %p39 = scmp.ge.s32.totalorder %s38, 2
      %s40 = scalar_select %p39, 0, %s38
      %s41 = ssub.s32 %s28, %s40
      %s42 = ssub.s32 %s29, %s36
      %s43 = sor.u32 %s41, %s42
      %p44 = scmp.eq.s32.totalorder %s43, 0
      %s46 = sadd.s32 %s45, 1
      %s47 = scalar_select %p44, %s45, %s46
      %p50 = pneg %p44
      %p51 = scmp.eq.s32.totalorder %s21, 1
      %p52 = por %p50, %p51
      %p53 = scmp.ne.s32.totalorder %s45, %s48
      %p54 = scmp.eq.s32.totalorder %s21, 0
      %p55 = por %p53, %p54
      %p56 = scmp.ne.s32.totalorder %s45, %s48
      %p57 = scmp.eq.s32.totalorder %s26, 1
      %p58 = por %p56, %p57
      %p59 = scmp.ne.s32.totalorder %s48, %s49
      %p60 = scmp.eq.s32.totalorder %s26, 0
      %p61 = por %p59, %p60
      %p62 = scmp.ne.s32.totalorder %s48, %s49
      %p63 = scmp.eq.s32.totalorder %s27, 1
      %p64 = por %p62, %p63
      %p66 = scmp.ne.s32.totalorder %s49, %s65
      %p67 = scmp.eq.s32.totalorder %s27, 0
      %p68 = por %p66, %p67
      %s70 = sadd.s32 %s69, 1
      %p73 = scmp.eq.s32.totalorder %s21, 1
      %p74 = scmp.ne.s32.totalorder %s69, %s71
      %p75 = scmp.eq.s32.totalorder %s21, 0
      %p76 = por %p74, %p75
      %p77 = scmp.ne.s32.totalorder %s69, %s71
      %p78 = scmp.eq.s32.totalorder %s26, 1
      %p79 = por %p77, %p78
      %p80 = scmp.ne.s32.totalorder %s71, %s72
      %p81 = scmp.eq.s32.totalorder %s26, 0
      %p82 = por %p80, %p81
      %p83 = scmp.ne.s32.totalorder %s71, %s72
      %p84 = scmp.eq.s32.totalorder %s27, 1
      %p85 = por %p83, %p84
      %p87 = scmp.ne.s32.totalorder %s72, %s86
      %p88 = scmp.eq.s32.totalorder %s27, 0
      %p89 = por %p87, %p88
      %s90 = ssub.s32 %s28, %s40
      %s91 = ssub.s32 %s29, %s36
      %s92 = sor.u32 %s90, %s91
      %p93 = scmp.eq.s32.totalorder %s92, 0
      %s95 = sadd.s32 %s94, 1
      %s96 = scalar_select %p93, %s94, %s95
      %p99 = pneg %p93
      %p100 = scmp.eq.s32.totalorder %s21, 1
      %p101 = por %p99, %p100
      %p102 = scmp.ne.s32.totalorder %s94, %s97
      %p103 = scmp.eq.s32.totalorder %s21, 0
      %p104 = por %p102, %p103
      %p105 = scmp.ne.s32.totalorder %s94, %s97
      %p106 = scmp.eq.s32.totalorder %s26, 1
      %p107 = por %p105, %p106
      %p108 = scmp.ne.s32.totalorder %s97, %s98
      %p109 = scmp.eq.s32.totalorder %s26, 0
      %p110 = por %p108, %p109
      %p111 = scmp.ne.s32.totalorder %s97, %s98
      %p112 = scmp.eq.s32.totalorder %s27, 1
      %p113 = por %p111, %p112
      %p115 = scmp.ne.s32.totalorder %s98, %s114
      %p116 = scmp.eq.s32.totalorder %s27, 0
      %p117 = por %p115, %p116
      %s118 = ssub.s32 %s28, %s40
      %s119 = ssub.s32 %s29, %s36
      %s120 = sor.u32 %s118, %s119
      %p121 = scmp.eq.s32.totalorder %s120, 0
      %s123 = sadd.s32 %s122, 1
      %s124 = scalar_select %p121, %s122, %s123
      %p127 = pneg %p121
      %p128 = scmp.eq.s32.totalorder %s21, 1
      %p129 = por %p127, %p128
      %p130 = scmp.ne.s32.totalorder %s122, %s125
      %p131 = scmp.eq.s32.totalorder %s21, 0
      %p132 = por %p130, %p131
      %p133 = scmp.ne.s32.totalorder %s122, %s125
      %p134 = scmp.eq.s32.totalorder %s26, 1
      %p135 = por %p133, %p134
      %p136 = scmp.ne.s32.totalorder %s125, %s126
      %p137 = scmp.eq.s32.totalorder %s26, 0
      %p138 = por %p136, %p137
      %p139 = scmp.ne.s32.totalorder %s125, %s126
      %p140 = scmp.eq.s32.totalorder %s27, 1
      %p141 = por %p139, %p140
      %p143 = scmp.ne.s32.totalorder %s126, %s142
      %p144 = scmp.eq.s32.totalorder %s27, 0
      %p145 = por %p143, %p144
      %s146 = ssub.s32 %s28, %s40
      %s147 = ssub.s32 %s29, %s36
      %s148 = sor.u32 %s146, %s147
      %p149 = scmp.eq.s32.totalorder %s148, 0
      %s151 = sadd.s32 %s150, 1
      %s152 = scalar_select %p149, %s150, %s151
      %p155 = pneg %p149
      %p156 = scmp.eq.s32.totalorder %s21, 1
      %p157 = por %p155, %p156
      %p158 = scmp.ne.s32.totalorder %s150, %s153
      %p159 = scmp.eq.s32.totalorder %s21, 0
      %p160 = por %p158, %p159
      %p161 = scmp.ne.s32.totalorder %s150, %s153
      %p162 = scmp.eq.s32.totalorder %s26, 1
      %p163 = por %p161, %p162
      %p164 = scmp.ne.s32.totalorder %s153, %s154
      %p165 = scmp.eq.s32.totalorder %s26, 0
      %p166 = por %p164, %p165
      %p167 = scmp.ne.s32.totalorder %s153, %s154
      %p168 = scmp.eq.s32.totalorder %s27, 1
      %p169 = por %p167, %p168
      %p171 = scmp.ne.s32.totalorder %s154, %s170
      %p172 = scmp.eq.s32.totalorder %s27, 0
      %p173 = por %p171, %p172
      %p174 = scmp.le.s32.totalorder 1, %s21
      %p175 = scmp.lt.s32.totalorder %s21, 3
      %p176 = pnand %p174, %p175
      %p177 = pneg %p176
      // Predicated region
      $region9: #{tpu_custom_call.1} parent=5 // pred_check
        _
      $region10: #{tpu_custom_call.1} parent=5 // pred_check_branch
        %179 = sbr.rel (%p176) target = $region12
      $region11: #{tpu_custom_call.1} parent=5 // pred_region
        %s180 = ssub.s32 %s21, 1
        // Predicated region
        $region13: #{tpu_custom_call.1} parent=11 // pred_check
          %p181 = pneg %p82
        $region14: #{tpu_custom_call.1} parent=11 // pred_check_branch
          %183 = sbr.rel (%p181) target = $region16
        $region15: #{tpu_custom_call.1} parent=11 // pred_region
          %s185 = ssub.s32 256, 256
          %186 = vsyncadd [#allocation6], %s185
          %s187 = sshll.u32 [#allocation5], 4
          %s188 = int_to_ptr.vmem [resolvable:$true] %s187
          %193 = dma.hbm_to_vmem [thread:$0]  %s1, 256, %s188, [#allocation6], 64, 64, 4
        $region16: #{tpu_custom_call.1} parent=11 // pred_fallthru
          _
      $region12: #{tpu_custom_call.1} parent=5 // pred_fallthru
        _
      %p194 = scmp.lt.s32.totalorder %s21, 2
      // Predicated region
      $region17: #{tpu_custom_call.1} parent=5 // pred_check
        %p195 = pneg %p194
      $region18: #{tpu_custom_call.1} parent=5 // pred_check_branch
        %197 = sbr.rel (%p195) target = $region20
      $region19: #{tpu_custom_call.1} parent=5 // pred_region
        // Predicated region
        $region21: #{tpu_custom_call.1} parent=19 // pred_check
          %p198 = pneg %p55
        $region22: #{tpu_custom_call.1} parent=19 // pred_check_branch
          %200 = sbr.rel (%p198) target = $region24
        $region23: #{tpu_custom_call.1} parent=19 // pred_region
          %s201 = sand.u32 %s45, 1
          %s202 = scalar_lea.sflag [#allocation3], %s201
          %s203 = sand.u32 %s45, 1
          %s204 = smul.addr %s203, 4
          %s205 = scalar_lea.vmem [#allocation2], %s204
          %s207 = ssub.s32 64, 64
          %208 = vsyncadd %s202, %s207
          %s209 = sadd.s32 %s29, %s28
          %s210 = smul.addr %s209, 64
          %s211 = scalar_lea.hbm %s0, %s210
          %s213 = sshll.u32 %s205, 4
          %s214 = int_to_ptr.vmem [resolvable:$true] %s213
          %216 = dma.hbm_to_vmem [thread:$0]  %s211, 64, %s214, %s202
        $region24: #{tpu_custom_call.1} parent=19 // pred_fallthru
          _
      $region20: #{tpu_custom_call.1} parent=5 // pred_fallthru
        _
      %p217 = scmp.le.s32.totalorder 1, %s21
      %p218 = scmp.lt.s32.totalorder %s21, 3
      %p219 = pnand %p217, %p218
      %p220 = pneg %p219
      // Predicated region
      $region25: #{tpu_custom_call.1} parent=5 // pred_check
        _
      $region26: #{tpu_custom_call.1} parent=5 // pred_check_branch
        %222 = sbr.rel (%p219) target = $region28
      $region27: #{tpu_custom_call.1} parent=5 // pred_region
        %s223 = ssub.s32 %s21, 1
        %s224 = sand.u32 %s48, 1
        %s225 = scalar_lea.sflag [#allocation3], %s224
        %s226 = sand.u32 %s48, 1
        %s227 = smul.addr %s226, 4
        %s228 = scalar_lea.vmem [#allocation2], %s227
        // Predicated region
        $region29: #{tpu_custom_call.1} parent=27 // pred_check
          %p229 = pneg %p61
        $region30: #{tpu_custom_call.1} parent=27 // pred_check_branch
          %231 = sbr.rel (%p229) target = $region32
        $region31: #{tpu_custom_call.1} parent=27 // pred_region
          %232 = dma.done %s225, 64
        $region32: #{tpu_custom_call.1} parent=27 // pred_fallthru
          _
        // Predicated region
        $region33: #{tpu_custom_call.1} parent=27 // pred_check
          %p233 = pneg %p82
        $region34: #{tpu_custom_call.1} parent=27 // pred_check_branch
          %235 = sbr.rel (%p233) target = $region36
        $region35: #{tpu_custom_call.1} parent=27 // pred_region
          %236 = dma.done [#allocation6], 256
        $region36: #{tpu_custom_call.1} parent=27 // pred_fallthru
          _
        %s237 = sand.u32 %s48, 1
        %s238 = scalar_lea.sflag [#allocation3], %s237
        %s239 = sand.u32 %s48, 1
        %s240 = smul.addr %s239, 4
        %s241 = scalar_lea.vmem [#allocation2], %s240
        %p242 = pneg %p61
        %p243 = pneg %p58
        %p244 = pneg %p82
        %p245 = pneg %p79
        %p246 = pneg %p110
        %p247 = pneg %p107
        %s248 = sand.u32 %s97, 1
        %s249 = scalar_lea.sflag [#allocation4], %s248
        %s250 = sand.u32 %s97, 1
        %s251 = smul.addr %s250, 32
        %s252 = scalar_lea.vmem [#allocation7], %s251
        %p253 = pneg %p138
        %p254 = pneg %p135
        %s255 = sand.u32 %s26, 1
        %s256 = scalar_lea.sflag [#allocation9], %s255
        %s257 = sand.u32 %s125, 1
        %s258 = smul.addr %s257, 32
        %s259 = scalar_lea.vmem [#allocation8], %s258
        %p260 = pneg %p166
        %p261 = pneg %p163
        %s262 = sand.u32 %s26, 1
        %s263 = scalar_lea.sflag [#allocation9], %s262
        %s264 = sand.u32 %s153, 1
        %s265 = smul.addr %s264, 32
        %s266 = scalar_lea.vmem [#allocation10], %s265
        %v268 = vld [vmem:[%s228] sm:$0xf]
        %v269 = vld [vmem:[#allocation5] sm:$0xf]
        %v270 = vld [vmem:[#allocation5 + $0x4] sm:$0xf]
        %v271 = vld [vmem:[#allocation5 + $0x8] sm:$0xf]
        %v272 = vld [vmem:[#allocation5 + $0xc] sm:$0xf]
        %v277 = vunpack.c.l.b16 %v269
        %v278 = vunpack.c.l.b16 %v270
        %v279 = vunpack.c.l.b16 %v271
        %v280 = vunpack.c.l.b16 %v272
        %v281 = vpack.c.b16 %v278, %v277
        %v282 = vpack.c.b16 %v280, %v279
        %vm285 = vcmask 261120
        %v287 = vsel %vm285, %v268, 0
        %289 = vmatprep.subr.bf16.mxu0 0
        %290 = vmatpush1.bf16.msra.mxu0 %v281
        %291 = vmatprep.subr.bf16.mxu0 0
        %292 = vmatpush1.bf16.msra.mxu0 %v282
        %293 = vmatprep.subr.bf16.mxu0 0
        %294 = vmatpush1.bf16.msra.mxu0 0
        %295 = vmatprep.subr.bf16.mxu0 0
        %296 = vmatpush1.bf16.msra.mxu0 0
        %297 = vmatprep.subr.bf16.mxu0 0
        %298 = vmatpush1.bf16.msra.mxu0 0
        %299 = vmatprep.subr.bf16.mxu0 0
        %300 = vmatpush1.bf16.msra.mxu0 0
        %301 = vmatprep.subr.bf16.mxu0 0
        %302 = vmatpush1.bf16.msra.mxu0 0
        %303 = vmatprep.subr.bf16.mxu0 0
        %304 = vmatpush1.bf16.msra.mxu0 0
        %305 = vmatprep.subr.bf16.mxu0 0
        %306 = vmatpush1.bf16.msra.mxu0 0
        %307 = vmatprep.subr.bf16.mxu0 0
        %308 = vmatpush1.bf16.msra.mxu0 0
        %309 = vmatprep.subr.bf16.mxu0 0
        %310 = vmatpush1.bf16.msra.mxu0 0
        %311 = vmatprep.subr.bf16.mxu0 0
        %312 = vmatpush1.bf16.msra.mxu0 0
        %313 = vmatprep.subr.bf16.mxu0 0
        %314 = vmatpush1.bf16.msra.mxu0 0
        %315 = vmatprep.subr.bf16.mxu0 0
        %316 = vmatpush1.bf16.msra.mxu0 0
        %317 = vmatprep.subr.bf16.mxu0 0
        %318 = vmatpush1.bf16.msra.mxu0 0
        %319 = vmatprep.subr.bf16.mxu0 0
        %320 = vmatpush1.bf16.msra.mxu0 0
        %321 = vmatprep.mubr.bf16.mxu0 0
        %322 = vmatmul.mubr.bf16.gmra.mrb[0].mxu0 %v287
        %v323 = vpop.f32.mrb[0].mxu0
        %v324 = vadd.f32 0.0, %v323
        %v325 = vpop.f32.mrb[0].mxu0
        %v326 = vpop.f32.mrb[0].mxu0
        %v327 = vpop.f32.mrb[0].mxu0
        %328 = vdwg.mxu0
        %v329 = vpack.c.bf16 %v324, %v324
        %331 = vrot.lane.b32.xlu0 %v329, 124
        %v332 = vpop.permute.xlu0 %331
        %334 = vrot.lane.b32.xlu0 %v329, 120
        %v335 = vpop.permute.xlu0 %334
        %337 = vrot.lane.b32.xlu0 %v329, 116
        %v338 = vpop.permute.xlu0 %337
        %340 = vrot.lane.b32.xlu0 %v329, 112
        %v341 = vpop.permute.xlu0 %340
        %343 = vrot.lane.b32.xlu0 %v329, 108
        %v344 = vpop.permute.xlu0 %343
        %346 = vrot.lane.b32.xlu0 %v329, 104
        %v347 = vpop.permute.xlu0 %346
        %349 = vrot.lane.b32.xlu0 %v329, 100
        %v350 = vpop.permute.xlu0 %349
        %v352 = vcombine.low %v329, %v341
        %v354 = vunpack.c.l.s4 1983009808
        %v355 = vunpack.c.0.s8 %v354
        %v356 = vlaneseq
        %v357 = vshrl.u32 %v356, 7
        %v358 = vsub.s32 %v355, %v357
        %v359 = vrot.slane %v352, %v358
        %v360 = vcombine.low %v335, %v347
        %v362 = vunpack.c.l.s4 1983009808
        %v363 = vunpack.c.0.s8 %v362
        %v364 = vlaneseq
        %v365 = vshrl.u32 %v364, 7
        %v366 = vsub.s32 %v363, %v365
        %v367 = vrot.slane %v360, %v366
        %v368 = vcombine.low %v359, %v367
        %v369 = vcombine.high %v359, %v367
        %v371 = vunpack.c.l.s4 1934713408
        %v372 = vunpack.c.0.s8 %v371
        %v373 = vlaneseq
        %v374 = vshrl.u32 %v373, 7
        %v375 = vsub.s32 %v372, %v374
        %v376 = vrot.slane %v368, %v375
        %v378 = vunpack.c.l.s4 1934713408
        %v379 = vunpack.c.0.s8 %v378
        %v380 = vlaneseq
        %v381 = vshrl.u32 %v380, 7
        %v382 = vsub.s32 %v379, %v381
        %v383 = vrot.slane %v369, %v382
        %v384 = vcombine.high %v376, 0
        %v385 = vcombine.high %v383, 0
        %v386 = vcombine.low %v332, %v344
        %v388 = vunpack.c.l.s4 1983009808
        %v389 = vunpack.c.0.s8 %v388
        %v390 = vlaneseq
        %v391 = vshrl.u32 %v390, 7
        %v392 = vsub.s32 %v389, %v391
        %v393 = vrot.slane %v386, %v392
        %v394 = vcombine.low %v338, %v350
        %v396 = vunpack.c.l.s4 1983009808
        %v397 = vunpack.c.0.s8 %v396
        %v398 = vlaneseq
        %v399 = vshrl.u32 %v398, 7
        %v400 = vsub.s32 %v397, %v399
        %v401 = vrot.slane %v394, %v400
        %v402 = vcombine.low %v393, %v401
        %v403 = vcombine.high %v393, %v401
        %v405 = vunpack.c.l.s4 1934713408
        %v406 = vunpack.c.0.s8 %v405
        %v407 = vlaneseq
        %v408 = vshrl.u32 %v407, 7
        %v409 = vsub.s32 %v406, %v408
        %v410 = vrot.slane %v402, %v409
        %v412 = vunpack.c.l.s4 1934713408
        %v413 = vunpack.c.0.s8 %v412
        %v414 = vlaneseq
        %v415 = vshrl.u32 %v414, 7
        %v416 = vsub.s32 %v413, %v415
        %v417 = vrot.slane %v403, %v416
        %v418 = vcombine.high %v410, 0
        %v419 = vcombine.high %v417, 0
        %v422 = vpack.i.b16 %v410, %v376
        %v424 = vshrl.u32 %v376, 16
        %v425 = vshrl.u32 %v410, 16
        %v426 = vpack.i.b16 %v425, %v424
        %v430 = vpack.i.b16 %v418, %v384
        %v432 = vshrl.u32 %v384, 16
        %v433 = vshrl.u32 %v418, 16
        %v434 = vpack.i.b16 %v433, %v432
        %v438 = vpack.i.b16 %v417, %v383
        %v440 = vshrl.u32 %v383, 16
        %v441 = vshrl.u32 %v417, 16
        %v442 = vpack.i.b16 %v441, %v440
        %v446 = vpack.i.b16 %v419, %v385
        %v448 = vshrl.u32 %v385, 16
        %v449 = vshrl.u32 %v419, 16
        %v450 = vpack.i.b16 %v449, %v448
        %v452 = vcombine.low %v422, %v438
        %v454 = vunpack.c.l.s4 1983009808
        %v455 = vunpack.c.0.s8 %v454
        %v456 = vlaneseq
        %v457 = vshrl.u32 %v456, 7
        %v458 = vsub.s32 %v455, %v457
        %v459 = vrot.slane %v452, %v458
        %v460 = vcombine.low %v430, %v446
        %v462 = vunpack.c.l.s4 1983009808
        %v463 = vunpack.c.0.s8 %v462
        %v464 = vlaneseq
        %v465 = vshrl.u32 %v464, 7
        %v466 = vsub.s32 %v463, %v465
        %v467 = vrot.slane %v460, %v466
        %v468 = vcombine.low %v459, %v467
        %v469 = vcombine.high %v459, %v467
        %v471 = vunpack.c.l.s4 1934713408
        %v472 = vunpack.c.0.s8 %v471
        %v473 = vlaneseq
        %v474 = vshrl.u32 %v473, 7
        %v475 = vsub.s32 %v472, %v474
        %v476 = vrot.slane %v468, %v475
        %v478 = vunpack.c.l.s4 1934713408
        %v479 = vunpack.c.0.s8 %v478
        %v480 = vlaneseq
        %v481 = vshrl.u32 %v480, 7
        %v482 = vsub.s32 %v479, %v481
        %v483 = vrot.slane %v469, %v482
        %v484 = vcombine.high %v476, 0
        %v485 = vcombine.high %v483, 0
        %v486 = vcombine.low %v426, %v442
        %v488 = vunpack.c.l.s4 1983009808
        %v489 = vunpack.c.0.s8 %v488
        %v490 = vlaneseq
        %v491 = vshrl.u32 %v490, 7
        %v492 = vsub.s32 %v489, %v491
        %v493 = vrot.slane %v486, %v492
        %v494 = vcombine.low %v434, %v450
        %v496 = vunpack.c.l.s4 1983009808
        %v497 = vunpack.c.0.s8 %v496
        %v498 = vlaneseq
        %v499 = vshrl.u32 %v498, 7
        %v500 = vsub.s32 %v497, %v499
        %v501 = vrot.slane %v494, %v500
        %v502 = vcombine.low %v493, %v501
        %v503 = vcombine.high %v493, %v501
        %v505 = vunpack.c.l.s4 1934713408
        %v506 = vunpack.c.0.s8 %v505
        %v507 = vlaneseq
        %v508 = vshrl.u32 %v507, 7
        %v509 = vsub.s32 %v506, %v508
        %v510 = vrot.slane %v502, %v509
        %v512 = vunpack.c.l.s4 1934713408
        %v513 = vunpack.c.0.s8 %v512
        %v514 = vlaneseq
        %v515 = vshrl.u32 %v514, 7
        %v516 = vsub.s32 %v513, %v515
        %v517 = vrot.slane %v503, %v516
        %v518 = vcombine.high %v510, 0
        %v519 = vcombine.high %v517, 0
        %v522 = vpack.i.b16 %v510, %v476
        %v524 = vshrl.u32 %v476, 16
        %v525 = vshrl.u32 %v510, 16
        %v526 = vpack.i.b16 %v525, %v524
        %v530 = vpack.i.b16 %v518, %v484
        %v532 = vshrl.u32 %v484, 16
        %v533 = vshrl.u32 %v518, 16
        %v534 = vpack.i.b16 %v533, %v532
        %v538 = vpack.i.b16 %v517, %v483
        %v540 = vshrl.u32 %v483, 16
        %v541 = vshrl.u32 %v517, 16
        %v542 = vpack.i.b16 %v541, %v540
        %v546 = vpack.i.b16 %v519, %v485
        %v548 = vshrl.u32 %v485, 16
        %v549 = vshrl.u32 %v519, 16
        %v550 = vpack.i.b16 %v549, %v548
        %vm552 = vcmask 27648
        %553 = vst.msk [vmem:[%s252] sm:$0xf] %vm552, %v522
        %554 = vst.msk [vmem:[%s252 + $0x4] sm:$0xf] %vm552, %v526
        %555 = vst.msk [vmem:[%s252 + $0x8] sm:$0xf] %vm552, %v530
        %556 = vst.msk [vmem:[%s252 + $0xc] sm:$0xf] %vm552, %v534
        %557 = vst.msk [vmem:[%s252 + $0x10] sm:$0xf] %vm552, %v538
        %558 = vst.msk [vmem:[%s252 + $0x14] sm:$0xf] %vm552, %v542
        %559 = vst.msk [vmem:[%s252 + $0x18] sm:$0xf] %vm552, %v546
        %560 = vst.msk [vmem:[%s252 + $0x1c] sm:$0xf] %vm552, %v550
        %561 = vrot.lane.b32.xlu0 %v329, 96
        %v562 = vpop.permute.xlu0 %561
        %563 = vrot.lane.b32.xlu0 %v332, 96
        %v564 = vpop.permute.xlu0 %563
        %565 = vrot.lane.b32.xlu0 %v335, 96
        %v566 = vpop.permute.xlu0 %565
        %567 = vrot.lane.b32.xlu0 %v338, 96
        %v568 = vpop.permute.xlu0 %567
        %569 = vrot.lane.b32.xlu0 %v341, 96
        %v570 = vpop.permute.xlu0 %569
        %571 = vrot.lane.b32.xlu0 %v344, 96
        %v572 = vpop.permute.xlu0 %571
        %573 = vrot.lane.b32.xlu0 %v347, 96
        %v574 = vpop.permute.xlu0 %573
        %575 = vrot.lane.b32.xlu0 %v350, 96
        %v576 = vpop.permute.xlu0 %575
        %v585 = vcombine.low %v562, %v570
        %v587 = vunpack.c.l.s4 1983009808
        %v588 = vunpack.c.0.s8 %v587
        %v589 = vlaneseq
        %v590 = vshrl.u32 %v589, 7
        %v591 = vsub.s32 %v588, %v590
        %v592 = vrot.slane %v585, %v591
        %v593 = vcombine.low %v566, %v574
        %v595 = vunpack.c.l.s4 1983009808
        %v596 = vunpack.c.0.s8 %v595
        %v597 = vlaneseq
        %v598 = vshrl.u32 %v597, 7
        %v599 = vsub.s32 %v596, %v598
        %v600 = vrot.slane %v593, %v599
        %v601 = vcombine.low %v592, %v600
        %v602 = vcombine.high %v592, %v600
        %v604 = vunpack.c.l.s4 1934713408
        %v605 = vunpack.c.0.s8 %v604
        %v606 = vlaneseq
        %v607 = vshrl.u32 %v606, 7
        %v608 = vsub.s32 %v605, %v607
        %v609 = vrot.slane %v601, %v608
        %v611 = vunpack.c.l.s4 1934713408
        %v612 = vunpack.c.0.s8 %v611
        %v613 = vlaneseq
        %v614 = vshrl.u32 %v613, 7
        %v615 = vsub.s32 %v612, %v614
        %v616 = vrot.slane %v602, %v615
        %v617 = vcombine.high %v609, 0
        %v618 = vcombine.high %v616, 0
        %v619 = vcombine.low %v564, %v572
        %v621 = vunpack.c.l.s4 1983009808
        %v622 = vunpack.c.0.s8 %v621
        %v623 = vlaneseq
        %v624 = vshrl.u32 %v623, 7
        %v625 = vsub.s32 %v622, %v624
        %v626 = vrot.slane %v619, %v625
        %v627 = vcombine.low %v568, %v576
        %v629 = vunpack.c.l.s4 1983009808
        %v630 = vunpack.c.0.s8 %v629
        %v631 = vlaneseq
        %v632 = vshrl.u32 %v631, 7
        %v633 = vsub.s32 %v630, %v632
        %v634 = vrot.slane %v627, %v633
        %v635 = vcombine.low %v626, %v634
        %v636 = vcombine.high %v626, %v634
        %v638 = vunpack.c.l.s4 1934713408
        %v639 = vunpack.c.0.s8 %v638
        %v640 = vlaneseq
        %v641 = vshrl.u32 %v640, 7
        %v642 = vsub.s32 %v639, %v641
        %v643 = vrot.slane %v635, %v642
        %v645 = vunpack.c.l.s4 1934713408
        %v646 = vunpack.c.0.s8 %v645
        %v647 = vlaneseq
        %v648 = vshrl.u32 %v647, 7
        %v649 = vsub.s32 %v646, %v648
        %v650 = vrot.slane %v636, %v649
        %v651 = vcombine.high %v643, 0
        %v652 = vcombine.high %v650, 0
        %v655 = vpack.i.b16 %v643, %v609
        %v657 = vshrl.u32 %v609, 16
        %v658 = vshrl.u32 %v643, 16
        %v659 = vpack.i.b16 %v658, %v657
        %v663 = vpack.i.b16 %v651, %v617
        %v665 = vshrl.u32 %v617, 16
        %v666 = vshrl.u32 %v651, 16
        %v667 = vpack.i.b16 %v666, %v665
        %v671 = vpack.i.b16 %v650, %v616
        %v673 = vshrl.u32 %v616, 16
        %v674 = vshrl.u32 %v650, 16
        %v675 = vpack.i.b16 %v674, %v673
        %v679 = vpack.i.b16 %v652, %v618
        %v681 = vshrl.u32 %v618, 16
        %v682 = vshrl.u32 %v652, 16
        %v683 = vpack.i.b16 %v682, %v681
        %v685 = vcombine.low %v655, %v671
        %v687 = vunpack.c.l.s4 1983009808
        %v688 = vunpack.c.0.s8 %v687
        %v689 = vlaneseq
        %v690 = vshrl.u32 %v689, 7
        %v691 = vsub.s32 %v688, %v690
        %v692 = vrot.slane %v685, %v691
        %v693 = vcombine.low %v663, %v679
        %v695 = vunpack.c.l.s4 1983009808
        %v696 = vunpack.c.0.s8 %v695
        %v697 = vlaneseq
        %v698 = vshrl.u32 %v697, 7
        %v699 = vsub.s32 %v696, %v698
        %v700 = vrot.slane %v693, %v699
        %v701 = vcombine.low %v692, %v700
        %v702 = vcombine.high %v692, %v700
        %v704 = vunpack.c.l.s4 1934713408
        %v705 = vunpack.c.0.s8 %v704
        %v706 = vlaneseq
        %v707 = vshrl.u32 %v706, 7
        %v708 = vsub.s32 %v705, %v707
        %v709 = vrot.slane %v701, %v708
        %v711 = vunpack.c.l.s4 1934713408
        %v712 = vunpack.c.0.s8 %v711
        %v713 = vlaneseq
        %v714 = vshrl.u32 %v713, 7
        %v715 = vsub.s32 %v712, %v714
        %v716 = vrot.slane %v702, %v715
        %v717 = vcombine.high %v709, 0
        %v718 = vcombine.high %v716, 0
        %v719 = vcombine.low %v659, %v675
        %v721 = vunpack.c.l.s4 1983009808
        %v722 = vunpack.c.0.s8 %v721
        %v723 = vlaneseq
        %v724 = vshrl.u32 %v723, 7
        %v725 = vsub.s32 %v722, %v724
        %v726 = vrot.slane %v719, %v725
        %v727 = vcombine.low %v667, %v683
        %v729 = vunpack.c.l.s4 1983009808
        %v730 = vunpack.c.0.s8 %v729
        %v731 = vlaneseq
        %v732 = vshrl.u32 %v731, 7
        %v733 = vsub.s32 %v730, %v732
        %v734 = vrot.slane %v727, %v733
        %v735 = vcombine.low %v726, %v734
        %v736 = vcombine.high %v726, %v734
        %v738 = vunpack.c.l.s4 1934713408
        %v739 = vunpack.c.0.s8 %v738
        %v740 = vlaneseq
        %v741 = vshrl.u32 %v740, 7
        %v742 = vsub.s32 %v739, %v741
        %v743 = vrot.slane %v735, %v742
        %v745 = vunpack.c.l.s4 1934713408
        %v746 = vunpack.c.0.s8 %v745
        %v747 = vlaneseq
        %v748 = vshrl.u32 %v747, 7
        %v749 = vsub.s32 %v746, %v748
        %v750 = vrot.slane %v736, %v749
        %v751 = vcombine.high %v743, 0
        %v752 = vcombine.high %v750, 0
        %v755 = vpack.i.b16 %v743, %v709
        %v757 = vshrl.u32 %v709, 16
        %v758 = vshrl.u32 %v743, 16
        %v759 = vpack.i.b16 %v758, %v757
        %v763 = vpack.i.b16 %v751, %v717
        %v765 = vshrl.u32 %v717, 16
        %v766 = vshrl.u32 %v751, 16
        %v767 = vpack.i.b16 %v766, %v765
        %v771 = vpack.i.b16 %v750, %v716
        %v773 = vshrl.u32 %v716, 16
        %v774 = vshrl.u32 %v750, 16
        %v775 = vpack.i.b16 %v774, %v773
        %v779 = vpack.i.b16 %v752, %v718
        %v781 = vshrl.u32 %v718, 16
        %v782 = vshrl.u32 %v752, 16
        %v783 = vpack.i.b16 %v782, %v781
        %785 = vst.msk [vmem:[%s259] sm:$0xf] %vm552, %v755
        %786 = vst.msk [vmem:[%s259 + $0x4] sm:$0xf] %vm552, %v759
        %787 = vst.msk [vmem:[%s259 + $0x8] sm:$0xf] %vm552, %v763
        %788 = vst.msk [vmem:[%s259 + $0xc] sm:$0xf] %vm552, %v767
        %789 = vst.msk [vmem:[%s259 + $0x10] sm:$0xf] %vm552, %v771
        %790 = vst.msk [vmem:[%s259 + $0x14] sm:$0xf] %vm552, %v775
        %791 = vst.msk [vmem:[%s259 + $0x18] sm:$0xf] %vm552, %v779
        %792 = vst.msk [vmem:[%s259 + $0x1c] sm:$0xf] %vm552, %v783
        %793 = vrot.lane.b32.xlu0 %v329, 64
        %v794 = vpop.permute.xlu0 %793
        %795 = vrot.lane.b32.xlu0 %v332, 64
        %v796 = vpop.permute.xlu0 %795
        %797 = vrot.lane.b32.xlu0 %v335, 64
        %v798 = vpop.permute.xlu0 %797
        %799 = vrot.lane.b32.xlu0 %v338, 64
        %v800 = vpop.permute.xlu0 %799
        %801 = vrot.lane.b32.xlu0 %v341, 64
        %v802 = vpop.permute.xlu0 %801
        %803 = vrot.lane.b32.xlu0 %v344, 64
        %v804 = vpop.permute.xlu0 %803
        %805 = vrot.lane.b32.xlu0 %v347, 64
        %v806 = vpop.permute.xlu0 %805
        %807 = vrot.lane.b32.xlu0 %v350, 64
        %v808 = vpop.permute.xlu0 %807
        %v817 = vcombine.low %v794, %v802
        %v819 = vunpack.c.l.s4 1983009808
        %v820 = vunpack.c.0.s8 %v819
        %v821 = vlaneseq
        %v822 = vshrl.u32 %v821, 7
        %v823 = vsub.s32 %v820, %v822
        %v824 = vrot.slane %v817, %v823
        %v825 = vcombine.low %v798, %v806
        %v827 = vunpack.c.l.s4 1983009808
        %v828 = vunpack.c.0.s8 %v827
        %v829 = vlaneseq
        %v830 = vshrl.u32 %v829, 7
        %v831 = vsub.s32 %v828, %v830
        %v832 = vrot.slane %v825, %v831
        %v833 = vcombine.low %v824, %v832
        %v834 = vcombine.high %v824, %v832
        %v836 = vunpack.c.l.s4 1934713408
        %v837 = vunpack.c.0.s8 %v836
        %v838 = vlaneseq
        %v839 = vshrl.u32 %v838, 7
        %v840 = vsub.s32 %v837, %v839
        %v841 = vrot.slane %v833, %v840
        %v843 = vunpack.c.l.s4 1934713408
        %v844 = vunpack.c.0.s8 %v843
        %v845 = vlaneseq
        %v846 = vshrl.u32 %v845, 7
        %v847 = vsub.s32 %v844, %v846
        %v848 = vrot.slane %v834, %v847
        %v849 = vcombine.high %v841, 0
        %v850 = vcombine.high %v848, 0
        %v851 = vcombine.low %v796, %v804
        %v853 = vunpack.c.l.s4 1983009808
        %v854 = vunpack.c.0.s8 %v853
        %v855 = vlaneseq
        %v856 = vshrl.u32 %v855, 7
        %v857 = vsub.s32 %v854, %v856
        %v858 = vrot.slane %v851, %v857
        %v859 = vcombine.low %v800, %v808
        %v861 = vunpack.c.l.s4 1983009808
        %v862 = vunpack.c.0.s8 %v861
        %v863 = vlaneseq
        %v864 = vshrl.u32 %v863, 7
        %v865 = vsub.s32 %v862, %v864
        %v866 = vrot.slane %v859, %v865
        %v867 = vcombine.low %v858, %v866
        %v868 = vcombine.high %v858, %v866
        %v870 = vunpack.c.l.s4 1934713408
        %v871 = vunpack.c.0.s8 %v870
        %v872 = vlaneseq
        %v873 = vshrl.u32 %v872, 7
        %v874 = vsub.s32 %v871, %v873
        %v875 = vrot.slane %v867, %v874
        %v877 = vunpack.c.l.s4 1934713408
        %v878 = vunpack.c.0.s8 %v877
        %v879 = vlaneseq
        %v880 = vshrl.u32 %v879, 7
        %v881 = vsub.s32 %v878, %v880
        %v882 = vrot.slane %v868, %v881
        %v883 = vcombine.high %v875, 0
        %v884 = vcombine.high %v882, 0
        %v887 = vpack.i.b16 %v875, %v841
        %v889 = vshrl.u32 %v841, 16
        %v890 = vshrl.u32 %v875, 16
        %v891 = vpack.i.b16 %v890, %v889
        %v895 = vpack.i.b16 %v883, %v849
        %v897 = vshrl.u32 %v849, 16
        %v898 = vshrl.u32 %v883, 16
        %v899 = vpack.i.b16 %v898, %v897
        %v903 = vpack.i.b16 %v882, %v848
        %v905 = vshrl.u32 %v848, 16
        %v906 = vshrl.u32 %v882, 16
        %v907 = vpack.i.b16 %v906, %v905
        %v911 = vpack.i.b16 %v884, %v850
        %v913 = vshrl.u32 %v850, 16
        %v914 = vshrl.u32 %v884, 16
        %v915 = vpack.i.b16 %v914, %v913
        %v917 = vcombine.low %v887, %v903
        %v919 = vunpack.c.l.s4 1983009808
        %v920 = vunpack.c.0.s8 %v919
        %v921 = vlaneseq
        %v922 = vshrl.u32 %v921, 7
        %v923 = vsub.s32 %v920, %v922
        %v924 = vrot.slane %v917, %v923
        %v925 = vcombine.low %v895, %v911
        %v927 = vunpack.c.l.s4 1983009808
        %v928 = vunpack.c.0.s8 %v927
        %v929 = vlaneseq
        %v930 = vshrl.u32 %v929, 7
        %v931 = vsub.s32 %v928, %v930
        %v932 = vrot.slane %v925, %v931
        %v933 = vcombine.low %v924, %v932
        %v934 = vcombine.high %v924, %v932
        %v936 = vunpack.c.l.s4 1934713408
        %v937 = vunpack.c.0.s8 %v936
        %v938 = vlaneseq
        %v939 = vshrl.u32 %v938, 7
        %v940 = vsub.s32 %v937, %v939
        %v941 = vrot.slane %v933, %v940
        %v943 = vunpack.c.l.s4 1934713408
        %v944 = vunpack.c.0.s8 %v943
        %v945 = vlaneseq
        %v946 = vshrl.u32 %v945, 7
        %v947 = vsub.s32 %v944, %v946
        %v948 = vrot.slane %v934, %v947
        %v949 = vcombine.high %v941, 0
        %v950 = vcombine.high %v948, 0
        %v951 = vcombine.low %v891, %v907
        %v953 = vunpack.c.l.s4 1983009808
        %v954 = vunpack.c.0.s8 %v953
        %v955 = vlaneseq
        %v956 = vshrl.u32 %v955, 7
        %v957 = vsub.s32 %v954, %v956
        %v958 = vrot.slane %v951, %v957
        %v959 = vcombine.low %v899, %v915
        %v961 = vunpack.c.l.s4 1983009808
        %v962 = vunpack.c.0.s8 %v961
        %v963 = vlaneseq
        %v964 = vshrl.u32 %v963, 7
        %v965 = vsub.s32 %v962, %v964
        %v966 = vrot.slane %v959, %v965
        %v967 = vcombine.low %v958, %v966
        %v968 = vcombine.high %v958, %v966
        %v970 = vunpack.c.l.s4 1934713408
        %v971 = vunpack.c.0.s8 %v970
        %v972 = vlaneseq
        %v973 = vshrl.u32 %v972, 7
        %v974 = vsub.s32 %v971, %v973
        %v975 = vrot.slane %v967, %v974
        %v977 = vunpack.c.l.s4 1934713408
        %v978 = vunpack.c.0.s8 %v977
        %v979 = vlaneseq
        %v980 = vshrl.u32 %v979, 7
        %v981 = vsub.s32 %v978, %v980
        %v982 = vrot.slane %v968, %v981
        %v983 = vcombine.high %v975, 0
        %v984 = vcombine.high %v982, 0
        %v987 = vpack.i.b16 %v975, %v941
        %v989 = vshrl.u32 %v941, 16
        %v990 = vshrl.u32 %v975, 16
        %v991 = vpack.i.b16 %v990, %v989
        %v995 = vpack.i.b16 %v983, %v949
        %v997 = vshrl.u32 %v949, 16
        %v998 = vshrl.u32 %v983, 16
        %v999 = vpack.i.b16 %v998, %v997
        %v1003 = vpack.i.b16 %v982, %v948
        %v1005 = vshrl.u32 %v948, 16
        %v1006 = vshrl.u32 %v982, 16
        %v1007 = vpack.i.b16 %v1006, %v1005
        %v1011 = vpack.i.b16 %v984, %v950
        %v1013 = vshrl.u32 %v950, 16
        %v1014 = vshrl.u32 %v984, 16
        %v1015 = vpack.i.b16 %v1014, %v1013
        %1017 = vst.msk [vmem:[%s266] sm:$0xf] %vm552, %v987
        %1018 = vst.msk [vmem:[%s266 + $0x4] sm:$0xf] %vm552, %v991
        %1019 = vst.msk [vmem:[%s266 + $0x8] sm:$0xf] %vm552, %v995
        %1020 = vst.msk [vmem:[%s266 + $0xc] sm:$0xf] %vm552, %v999
        %1021 = vst.msk [vmem:[%s266 + $0x10] sm:$0xf] %vm552, %v1003
        %1022 = vst.msk [vmem:[%s266 + $0x14] sm:$0xf] %vm552, %v1007
        %1023 = vst.msk [vmem:[%s266 + $0x18] sm:$0xf] %vm552, %v1011
        %1024 = vst.msk [vmem:[%s266 + $0x1c] sm:$0xf] %vm552, %v1015
        %s1025 = sand.u32 %s97, 1
        %s1026 = scalar_lea.sflag [#allocation4], %s1025
        %s1027 = sand.u32 %s97, 1
        %s1028 = smul.addr %s1027, 32
        %s1029 = scalar_lea.vmem [#allocation7], %s1028
        %s1030 = sand.u32 %s26, 1
        %s1031 = scalar_lea.sflag [#allocation9], %s1030
        %s1032 = sand.u32 %s125, 1
        %s1033 = smul.addr %s1032, 32
        %s1034 = scalar_lea.vmem [#allocation8], %s1033
        %s1035 = sand.u32 %s26, 1
        %s1036 = scalar_lea.sflag [#allocation9], %s1035
        %s1037 = sand.u32 %s153, 1
        %s1038 = smul.addr %s1037, 32
        %s1039 = scalar_lea.vmem [#allocation10], %s1038
        // Predicated region
        $region37: #{tpu_custom_call.1} parent=27 // pred_check
          %p1040 = pneg %p107
        $region38: #{tpu_custom_call.1} parent=27 // pred_check_branch
          %1042 = sbr.rel (%p1040) target = $region40
        $region39: #{tpu_custom_call.1} parent=27 // pred_region
          %s1044 = ssub.s32 512, 512
          %1045 = vsyncadd %s1026, %s1044
          %s1046 = smul.addr %s30, 8
          %s1047 = sadd.s32 %s31, %s1046
          %s1048 = smul.addr %s1047, 64
          %s1049 = scalar_lea.hbm %s2, %s1048
          %s1050 = sshll.u32 %s1029, 4
          %s1051 = int_to_ptr.vmem [resolvable:$true] %s1050
          %1056 = dma.vmem_to_hbm [thread:$0]  %s1051, 512, %s1049, %s1026, 64, 64, 4
        $region40: #{tpu_custom_call.1} parent=27 // pred_fallthru
          _
        // Predicated region
        $region41: #{tpu_custom_call.1} parent=27 // pred_check
          %p1057 = pneg %p135
        $region42: #{tpu_custom_call.1} parent=27 // pred_check_branch
          %1059 = sbr.rel (%p1057) target = $region44
        $region43: #{tpu_custom_call.1} parent=27 // pred_region
          %s1061 = ssub.s32 512, 512
          %1062 = vsyncadd %s1031, %s1061
          %s1063 = smul.addr %s30, 8
          %s1064 = sadd.s32 %s31, %s1063
          %s1065 = smul.addr %s1064, 64
          %s1066 = scalar_lea.hbm %s3, %s1065
          %s1067 = sshll.u32 %s1034, 4
          %s1068 = int_to_ptr.vmem [resolvable:$true] %s1067
          %1073 = dma.vmem_to_hbm [thread:$0]  %s1068, 512, %s1066, %s1031, 64, 64, 4
        $region44: #{tpu_custom_call.1} parent=27 // pred_fallthru
          _
        // Predicated region
        $region45: #{tpu_custom_call.1} parent=27 // pred_check
          %p1074 = pneg %p163
        $region46: #{tpu_custom_call.1} parent=27 // pred_check_branch
          %1076 = sbr.rel (%p1074) target = $region48
        $region47: #{tpu_custom_call.1} parent=27 // pred_region
          %s1078 = ssub.s32 512, 512
          %1079 = vsyncadd %s1036, %s1078
          %s1080 = smul.addr %s30, 8
          %s1081 = sadd.s32 %s31, %s1080
          %s1082 = smul.addr %s1081, 64
          %s1083 = scalar_lea.hbm %s4, %s1082
          %s1084 = sshll.u32 %s1039, 4
          %s1085 = int_to_ptr.vmem [resolvable:$true] %s1084
          %1090 = dma.vmem_to_hbm [thread:$0]  %s1085, 512, %s1083, %s1036, 64, 64, 4
        $region48: #{tpu_custom_call.1} parent=27 // pred_fallthru
          _
      $region28: #{tpu_custom_call.1} parent=5 // pred_fallthru
        _
      %p1091 = scmp.le.s32.totalorder 2, %s21
      // Predicated region
      $region49: #{tpu_custom_call.1} parent=5 // pred_check
        %p1092 = pneg %p1091
      $region50: #{tpu_custom_call.1} parent=5 // pred_check_branch
        %1094 = sbr.rel (%p1092) target = $region52
      $region51: #{tpu_custom_call.1} parent=5 // pred_region
        %s1095 = ssub.s32 %s21, 2
        // Predicated region
        $region53: #{tpu_custom_call.1} parent=51 // pred_check
          %p1096 = pneg %p113
        $region54: #{tpu_custom_call.1} parent=51 // pred_check_branch
          %1098 = sbr.rel (%p1096) target = $region56
        $region55: #{tpu_custom_call.1} parent=51 // pred_region
          %s1099 = sand.u32 %s98, 1
          %s1100 = scalar_lea.sflag [#allocation4], %s1099
          %s1101 = sand.u32 %s98, 1
          %s1102 = smul.addr %s1101, 32
          %s1103 = scalar_lea.vmem [#allocation7], %s1102
          %1104 = dma.done %s1100, 512
        $region56: #{tpu_custom_call.1} parent=51 // pred_fallthru
          _
        // Predicated region
        $region57: #{tpu_custom_call.1} parent=51 // pred_check
          %p1105 = pneg %p141
        $region58: #{tpu_custom_call.1} parent=51 // pred_check_branch
          %1107 = sbr.rel (%p1105) target = $region60
        $region59: #{tpu_custom_call.1} parent=51 // pred_region
          %s1108 = sand.u32 %s27, 1
          %s1109 = scalar_lea.sflag [#allocation9], %s1108
          %s1110 = sand.u32 %s126, 1
          %s1111 = smul.addr %s1110, 32
          %s1112 = scalar_lea.vmem [#allocation8], %s1111
          %1113 = dma.done %s1109, 512
        $region60: #{tpu_custom_call.1} parent=51 // pred_fallthru
          _
        // Predicated region
        $region61: #{tpu_custom_call.1} parent=51 // pred_check
          %p1114 = pneg %p169
        $region62: #{tpu_custom_call.1} parent=51 // pred_check_branch
          %1116 = sbr.rel (%p1114) target = $region64
        $region63: #{tpu_custom_call.1} parent=51 // pred_region
          %s1117 = sand.u32 %s27, 1
          %s1118 = scalar_lea.sflag [#allocation9], %s1117
          %s1119 = sand.u32 %s154, 1
          %s1120 = smul.addr %s1119, 32
          %s1121 = scalar_lea.vmem [#allocation10], %s1120
          %1122 = dma.done %s1118, 512
        $region64: #{tpu_custom_call.1} parent=51 // pred_fallthru
          _
      $region52: #{tpu_custom_call.1} parent=5 // pred_fallthru
        _
    $region6: #{tpu_custom_call.1} parent=1 // loop_footer
      %s25 = sadd.s32 1, %s21
    $region7: #{tpu_custom_call.1} parent=1 // loop_footer_branch
      %20 = sbr.rel target = $region3
    $region8: #{tpu_custom_call.1} parent=1 // loop_exit
      _
    %1123 = vsyncpa [#allocation3], 1
    %s1124 = scalar_lea.sflag [#allocation3], 1
    %1125 = vsyncpa %s1124, 1
    %1126 = vsyncpa [#allocation6], 1
    %1127 = vsyncpa [#allocation4], 1
    %s1128 = scalar_lea.sflag [#allocation4], 1
    %1129 = vsyncpa %s1128, 1
    %1130 = vsyncpa [#allocation9], 1
    %s1131 = scalar_lea.sflag [#allocation9], 1
    %1132 = vsyncpa %s1131, 1

</llo_original>
